<compile_context>
chip_gen: v5e
topology: v5e:2x2
jax: 0.10.0
libtpu: 0.0.40
codegen_flags: <defaults>
</compile_context>

<pallas_src>
import functools

import jax
import jax.numpy as jnp
from jax.experimental import pallas as pl
from jax.experimental.pallas import tpu as pltpu

_IN_PAD = 8          # pad in_C -> 8 so layer 1 is a single MXU contraction
_H_PAD = 128         # lane-align the hidden dim (one full lane tile)
_OUT_PAD = 8         # narrow output slab: out_C padded to 8 (16x less writeback than 128)
_MAX_TILE_B = 4096   # per perf review; paired with vmem_limit_bytes=48 MiB
_NEG_BIG = -1e30     # "-inf" bias for padded output columns (f32 logits -> exp underflows to 0)


def _round_up(x, m):
    return ((x + m - 1) // m) * m


def _actor_kernel(x_ref, w1_ref, b1_ref, w2_ref, b2_ref, out_ref):
    """One batch tile of the whole network.

    x_ref : (TILE_B, _IN_PAD)     f32   (real features in [:, :in_C], rest 0)
    w1_ref: (_IN_PAD, _H_PAD)     f32   (real block in [:in_C, :hidden], rest 0)
    b1_ref: (1, _H_PAD)           f32   (real bias in [:hidden], rest 0)
    w2_ref: (_H_PAD, _OUT_PAD)    f32   (real block in [:hidden, :out_C], rest 0)
    b2_ref: (1, _OUT_PAD)         f32   (real bias in [:out_C], rest -1e30)
    out   : (TILE_B, _OUT_PAD)    f32   softmax probs in [:, :out_C], 0 elsewhere
    """
    # ---- Layer 1 on the MXU (K = 8 padded contraction; padded cols/rows are 0) ----
    h = jnp.dot(x_ref[...], w1_ref[...], preferred_element_type=jnp.float32) + b1_ref[...]
    h = jnp.maximum(h, 0.0)                                  # (TILE_B, _H_PAD)

    # ---- Layer 2 on the MXU: f32 accumulation, 8-wide output ----
    logits = jnp.dot(h, w2_ref[...], preferred_element_type=jnp.float32) + b2_ref[...]

    # ---- Stable softmax over the 8-wide padded slab.  Padded columns carry a
    #      -1e30 bias, so exp(logit - m) underflows to exactly 0 there and the
    #      row max / denominator are driven only by the real logits. ----
    m = jnp.max(logits, axis=-1, keepdims=True)
    e = jnp.exp(logits - m)
    denom = jnp.sum(e, axis=-1, keepdims=True)
    r = pl.reciprocal(denom, approx=True)        # EUP vrcp (free slot)
    r = r * (2.0 - denom * r)                    # one Newton-Raphson step on the VPU
    out_ref[...] = e * r


def pad_actor_params(w1, b1, w2, b2):
    """Pad weights once to tile-aligned slabs (done outside the kernel)."""
    in_c, hidden = w1.shape
    out_c = w2.shape[1]
    assert in_c <= _IN_PAD and hidden <= _H_PAD and out_c <= _OUT_PAD
    w1p = jnp.zeros((_IN_PAD, _H_PAD), jnp.float32).at[:in_c, :hidden].set(w1)
    b1p = jnp.zeros((1, _H_PAD), jnp.float32).at[:, :hidden].set(b1.reshape(1, hidden))
    w2p = jnp.zeros((_H_PAD, _OUT_PAD), jnp.float32).at[:hidden, :out_c].set(w2)
    b2p = jnp.full((1, _OUT_PAD), _NEG_BIG, jnp.float32).at[:, :out_c].set(b2.reshape(1, out_c))
    return w1p, b1p, w2p, b2p


@functools.partial(jax.jit, static_argnames=("out_c",))
def actor_net_forward(x, w1p, b1p, w2p, b2p, *, out_c):
    """x: (B, in_C) f32.  Params must already be padded via pad_actor_params."""
    x = x.astype(jnp.float32)
    B, in_c = x.shape
    assert in_c <= _IN_PAD

    # Pad the feature dim once so layer 1 is a single K=8 MXU contraction.
    if in_c != _IN_PAD:
        x = jnp.pad(x, ((0, 0), (0, _IN_PAD - in_c)))

    # Batch tiling:
    #   * small B   -> one sublane-aligned tile
    #   * medium B  -> split into >=2 tiles so v7x's second TensorCore gets work
    #                  (parallel grid axis is sharded across cores; ~free on 1-TC chips)
    #   * large B   -> cap at _MAX_TILE_B to stay inside scoped VMEM
    if B <= 256:
        tile_b = _round_up(B, 8)
    elif B <= _MAX_TILE_B:
        tile_b = _round_up(pl.cdiv(B, 2), 8)
    else:
        tile_b = _MAX_TILE_B
    num_tiles = pl.cdiv(B, tile_b)
    b_pad = num_tiles * tile_b
    if b_pad != B:
        x = jnp.pad(x, ((0, b_pad - B), (0, 0)))

    grid_spec = pltpu.PrefetchScalarGridSpec(
        num_scalar_prefetch=0,
        grid=(num_tiles,),
        in_specs=[
            pl.BlockSpec((tile_b, _IN_PAD), lambda i: (i, 0)),    # streamed per tile
            pl.BlockSpec((_IN_PAD, _H_PAD), lambda i: (0, 0)),    # VMEM-resident weights
            pl.BlockSpec((1, _H_PAD), lambda i: (0, 0)),
            pl.BlockSpec((_H_PAD, _OUT_PAD), lambda i: (0, 0)),
            pl.BlockSpec((1, _OUT_PAD), lambda i: (0, 0)),
        ],
        out_specs=pl.BlockSpec((tile_b, _OUT_PAD), lambda i: (i, 0)),
    )

    # Advisory cost hint (tiny compute / tiny bytes) so XLA doesn't treat the
    # custom call as expensive.
    cost = pl.CostEstimate(
        flops=2 * b_pad * (_IN_PAD * _H_PAD + _H_PAD * _OUT_PAD),
        transcendentals=b_pad * _OUT_PAD,
        bytes_accessed=4 * (b_pad * _IN_PAD + b_pad * _OUT_PAD
                            + w1p.size + b1p.size + w2p.size + b2p.size),
    )

    out_padded = pl.pallas_call(
        _actor_kernel,
        out_shape=jax.ShapeDtypeStruct((b_pad, _OUT_PAD), jnp.float32),
        grid_spec=grid_spec,
        compiler_params=pltpu.CompilerParams(
            dimension_semantics=("parallel",),
            vmem_limit_bytes=48 * 1024 * 1024,
        ),
        cost_estimate=cost,
    )(x, w1p, b1p, w2p, b2p)

    return out_padded[:B, :out_c]


def init_params(key, in_c, hidden, out_c):
    """Deterministic init mimicking torch.nn.Linear (U(-1/sqrt(fan_in), +1/sqrt(fan_in)))."""
    k1, k2, k3, k4 = jax.random.split(key, 4)
    lim1 = 1.0 / jnp.sqrt(jnp.float32(in_c))
    lim2 = 1.0 / jnp.sqrt(jnp.float32(hidden))
    # Stored as (in_features, out_features) — transposed vs. torch's (out, in).
    w1 = jax.random.uniform(k1, (in_c, hidden), jnp.float32, -lim1, lim1)
    b1 = jax.random.uniform(k2, (1, hidden), jnp.float32, -lim1, lim1)
    w2 = jax.random.uniform(k3, (hidden, out_c), jnp.float32, -lim2, lim2)
    b2 = jax.random.uniform(k4, (1, out_c), jnp.float32, -lim2, lim2)
    return w1, b1, w2, b2


def reference_forward(x, w1, b1, w2, b2):
    h = jnp.maximum(x @ w1 + b1, 0.0)
    logits = h @ w2 + b2
    return jax.nn.softmax(logits, axis=-1)


if __name__ == "__main__":
    # CartPole-sized actor: state dim 4, 2 actions, hidden 32; small batch of 8.
    B, IN_C, HIDDEN, OUT_C = 8, 4, 32, 2

    key = jax.random.PRNGKey(0)
    kx, kp, kx2 = jax.random.split(key, 3)
    x = jax.random.normal(kx, (B, IN_C), jnp.float32)
    w1, b1, w2, b2 = init_params(kp, IN_C, HIDDEN, OUT_C)

    # Pad weights once; reuse across every forward call.
    w1p, b1p, w2p, b2p = pad_actor_params(w1, b1, w2, b2)

    out = actor_net_forward(x, w1p, b1p, w2p, b2p, out_c=OUT_C)
    out = jax.block_until_ready(out)

    ref = reference_forward(x, w1, b1, w2, b2)
    assert out.shape == (B, OUT_C)
    assert jnp.allclose(out, ref, atol=1e-3, rtol=1e-3), "mismatch vs reference"
    assert jnp.allclose(jnp.sum(out, axis=-1), 1.0, atol=1e-3), "rows must sum to 1"

    # Second check: a batch that exercises the multi-tile path and row padding.
    B2 = 600
    x2 = jax.random.normal(kx2, (B2, IN_C), jnp.float32)
    out2 = jax.block_until_ready(actor_net_forward(x2, w1p, b1p, w2p, b2p, out_c=OUT_C))
    ref2 = reference_forward(x2, w1, b1, w2, b2)
    assert out2.shape == (B2, OUT_C)
    assert jnp.allclose(out2, ref2, atol=1e-3, rtol=1e-3), "mismatch vs reference (tiled)"
    assert jnp.allclose(jnp.sum(out2, axis=-1), 1.0, atol=1e-3)

    print("KERNEL_OK")
</pallas_src>

<mosaic_0001>
module attributes {stable_mosaic.version = 11 : i64} {
  func.func @_actor_kernel(%arg0: i32, %arg1: memref<8x8xf32, #tpu.memory_space<vmem>>, %arg2: memref<8x128xf32, #tpu.memory_space<vmem>>, %arg3: memref<1x128xf32, #tpu.memory_space<vmem>>, %arg4: memref<128x8xf32, #tpu.memory_space<vmem>>, %arg5: memref<1x8xf32, #tpu.memory_space<vmem>>, %arg6: memref<8x8xf32, #tpu.memory_space<vmem>>) attributes {dimension_semantics = [#tpu.dimension_semantics<parallel>], iteration_bounds = array<i64: 1>, scalar_prefetch = 0 : i64, scratch_operands = 0 : i64, tpu.core_type = #tpu.core_type<tc>, window_params = [{transform_indices = @transform_0, window_bounds = array<i64: 8, 8>}, {pipeline_mode = #tpu.pipeline_mode<synchronous>, transform_indices = @transform_1, window_bounds = array<i64: 8, 128>}, {pipeline_mode = #tpu.pipeline_mode<synchronous>, transform_indices = @transform_2, window_bounds = array<i64: 1, 128>}, {pipeline_mode = #tpu.pipeline_mode<synchronous>, transform_indices = @transform_3, window_bounds = array<i64: 128, 8>}, {pipeline_mode = #tpu.pipeline_mode<synchronous>, transform_indices = @transform_4, window_bounds = array<i64: 1, 8>}, {transform_indices = @transform_5, window_bounds = array<i64: 8, 8>}]} {
    %c0 = arith.constant 0 : index
    %c0_0 = arith.constant 0 : index
    %0 = vector.load %arg1[%c0, %c0_0] : memref<8x8xf32, #tpu.memory_space<vmem>>, vector<8x8xf32>
    %c0_1 = arith.constant 0 : index
    %c0_2 = arith.constant 0 : index
    %1 = vector.load %arg2[%c0_1, %c0_2] : memref<8x128xf32, #tpu.memory_space<vmem>>, vector<8x128xf32>
    %cst = arith.constant dense<0.000000e+00> : vector<8x128xf32>
    %2 = tpu.matmul %0, %1, %cst {dimension_numbers = #tpu.dot_dimension_numbers<[1], [0], [0], [1], [0, 0, 1, 1], [], []>} : vector<8x8xf32>, vector<8x128xf32>, vector<8x128xf32> -> vector<8x128xf32>
    %c0_3 = arith.constant 0 : index
    %c0_4 = arith.constant 0 : index
    %3 = vector.load %arg3[%c0_3, %c0_4] : memref<1x128xf32, #tpu.memory_space<vmem>>, vector<1x128xf32>
    %4 = vector.broadcast %3 : vector<1x128xf32> to vector<8x128xf32>
    %5 = arith.addf %2, %4 : vector<8x128xf32>
    %cst_5 = arith.constant 0.000000e+00 : f32
    %6 = vector.broadcast %cst_5 : f32 to vector<8x128xf32>
    %7 = arith.maximumf %5, %6 : vector<8x128xf32>
    %c0_6 = arith.constant 0 : index
    %c0_7 = arith.constant 0 : index
    %8 = vector.load %arg4[%c0_6, %c0_7] : memref<128x8xf32, #tpu.memory_space<vmem>>, vector<128x8xf32>
    %cst_8 = arith.constant dense<0.000000e+00> : vector<8x8xf32>
    %9 = tpu.matmul %7, %8, %cst_8 {dimension_numbers = #tpu.dot_dimension_numbers<[1], [0], [0], [1], [0, 0, 1, 1], [], []>} : vector<8x128xf32>, vector<128x8xf32>, vector<8x8xf32> -> vector<8x8xf32>
    %c0_9 = arith.constant 0 : index
    %c0_10 = arith.constant 0 : index
    %10 = vector.load %arg5[%c0_9, %c0_10] : memref<1x8xf32, #tpu.memory_space<vmem>>, vector<1x8xf32>
    %11 = vector.broadcast %10 : vector<1x8xf32> to vector<8x8xf32>
    %12 = arith.addf %9, %11 : vector<8x8xf32>
    %cst_11 = arith.constant dense<0xFF800000> : vector<8xf32>
    %13 = vector.multi_reduction <maximumf>, %12, %cst_11 [1] : vector<8x8xf32> to vector<8xf32>
    %14 = vector.shape_cast %13 : vector<8xf32> to vector<8x1xf32>
    %15 = vector.broadcast %14 : vector<8x1xf32> to vector<8x8xf32>
    %16 = arith.subf %12, %15 : vector<8x8xf32>
    %17 = math.exp %16 : vector<8x8xf32>
    %cst_12 = arith.constant dense<0.000000e+00> : vector<8xf32>
    %18 = vector.multi_reduction <add>, %17, %cst_12 [1] : vector<8x8xf32> to vector<8xf32>
    %19 = vector.shape_cast %18 : vector<8xf32> to vector<8x1xf32>
    %20 = tpu.reciprocal %19 {approx = true} : vector<8x1xf32> -> vector<8x1xf32>
    %21 = arith.mulf %19, %20 : vector<8x1xf32>
    %cst_13 = arith.constant 2.000000e+00 : f32
    %22 = vector.broadcast %cst_13 : f32 to vector<8x1xf32>
    %23 = arith.subf %22, %21 : vector<8x1xf32>
    %24 = arith.mulf %20, %23 : vector<8x1xf32>
    %25 = vector.broadcast %24 : vector<8x1xf32> to vector<8x8xf32>
    %26 = arith.mulf %17, %25 : vector<8x8xf32>
    %c0_14 = arith.constant 0 : index
    %c0_15 = arith.constant 0 : index
    %27 = vector.load %arg6[%c0_14, %c0_15] : memref<8x8xf32, #tpu.memory_space<vmem>>, vector<8x8xf32>
    tpu.vector_store %arg6[%c0_14, %c0_15], %26 {strides = array<i32>} : memref<8x8xf32, #tpu.memory_space<vmem>>, vector<8x8xf32>,
    return
  }
  func.func @transform_0(%arg0: i32) -> (i32, i32) {
    %c0_i32 = arith.constant 0 : i32
    %c0_i32_0 = arith.constant 0 : i32
    return %arg0, %c0_i32 : i32, i32
  }
  func.func @transform_1(%arg0: i32) -> (i32, i32) {
    %c0_i32 = arith.constant 0 : i32
    %c0_i32_0 = arith.constant 0 : i32
    %c0_i32_1 = arith.constant 0 : i32
    return %c0_i32, %c0_i32_0 : i32, i32
  }
  func.func @transform_2(%arg0: i32) -> (i32, i32) {
    %c0_i32 = arith.constant 0 : i32
    %c0_i32_0 = arith.constant 0 : i32
    %c0_i32_1 = arith.constant 0 : i32
    return %c0_i32, %c0_i32_0 : i32, i32
  }
  func.func @transform_3(%arg0: i32) -> (i32, i32) {
    %c0_i32 = arith.constant 0 : i32
    %c0_i32_0 = arith.constant 0 : i32
    %c0_i32_1 = arith.constant 0 : i32
    return %c0_i32, %c0_i32_0 : i32, i32
  }
  func.func @transform_4(%arg0: i32) -> (i32, i32) {
    %c0_i32 = arith.constant 0 : i32
    %c0_i32_0 = arith.constant 0 : i32
    %c0_i32_1 = arith.constant 0 : i32
    return %c0_i32, %c0_i32_0 : i32, i32
  }
  func.func @transform_5(%arg0: i32) -> (i32, i32) {
    %c0_i32 = arith.constant 0 : i32
    %c0_i32_0 = arith.constant 0 : i32
    return %arg0, %c0_i32 : i32, i32
  }
}

</mosaic_0001>

<llo_original>
// kernel: actor_net_forward.1
$region0: #{actor_net_forward.1}
  #allocation0 [shape = 'u32[]', space=smem, size = 0x4, offset = 0x4, fixed_abs, tag = 'smem constant byte address 0x4 - core index']
  #allocation1 [shape = 'u32[72,128]{1,0:T(1,128)}', space=vmem, size = 0x9000, scoped, tag = 'internal scratch']
  %s0 = inlined_call_operand.vmem [shape: f32[8,8], index: 0, kind: input, shape index: {}]
  %s1 = inlined_call_operand.vmem [shape: f32[8,128], index: 1, kind: input, shape index: {}]
  %s2 = inlined_call_operand.vmem [shape: f32[1,128], index: 2, kind: input, shape index: {}]
  %s3 = inlined_call_operand.vmem [shape: f32[128,8], index: 3, kind: input, shape index: {}]
  %s4 = inlined_call_operand.vmem [shape: f32[1,8], index: 4, kind: input, shape index: {}]
  %s5 = inlined_call_operand.vmem [shape: f32[8,8], index: 5, kind: output, shape index: {}]
  %s6 = sld [smem:[#allocation0]]
  $region30: #{actor_net_forward.1} parent=0
    _
  %s8 = ssub.s32 1, %s6
  %s9 = scalar_select 0, %s8, %s6
  // Predicated region
  $region2: #{actor_net_forward.1} parent=0 // pred_check
    _
  $region3: #{actor_net_forward.1} parent=0 // pred_check_branch
    %11 = sbr.rel (0) target = $region5
  $region4: #{actor_net_forward.1} parent=0 // pred_region
    _
  $region5: #{actor_net_forward.1} parent=0 // pred_fallthru
    _
  // Predicated region
  $region6: #{actor_net_forward.1} parent=0 // pred_check
    _
  $region7: #{actor_net_forward.1} parent=0 // pred_check_branch
    %13 = sbr.rel (0) target = $region9
  $region8: #{actor_net_forward.1} parent=0 // pred_region
    _
  $region9: #{actor_net_forward.1} parent=0 // pred_fallthru
    _
  // Predicated region
  $region10: #{actor_net_forward.1} parent=0 // pred_check
    _
  $region11: #{actor_net_forward.1} parent=0 // pred_check_branch
    %15 = sbr.rel (0) target = $region13
  $region12: #{actor_net_forward.1} parent=0 // pred_region
    _
  $region13: #{actor_net_forward.1} parent=0 // pred_fallthru
    _
  // Predicated region
  $region14: #{actor_net_forward.1} parent=0 // pred_check
    _
  $region15: #{actor_net_forward.1} parent=0 // pred_check_branch
    %17 = sbr.rel (0) target = $region17
  $region16: #{actor_net_forward.1} parent=0 // pred_region
    _
  $region17: #{actor_net_forward.1} parent=0 // pred_fallthru
    _
  // Predicated region
  $region18: #{actor_net_forward.1} parent=0 // pred_check
    _
  $region19: #{actor_net_forward.1} parent=0 // pred_check_branch
    %19 = sbr.rel (0) target = $region21
  $region20: #{actor_net_forward.1} parent=0 // pred_region
    _
  $region21: #{actor_net_forward.1} parent=0 // pred_fallthru
    _
  %v20 = vld [vmem:[%s0] sm:$0xff]
  %v21 = vld [vmem:[%s1] sm:$0xff]
  %v22 = vld [vmem:[%s2] sm:$0x1]
  %v24 = vperm.slane %v22, 0
  %vm26 = vcmask 64512
  %v28 = vsel %vm26, %v20, 0
  %30 = vmatpush.msra.mxu0 0.0
  %31 = vmatpush.msra.mxu0 0.0
  %32 = vmatpush.msra.mxu0 0.0
  %33 = vmatpush.msra.mxu0 0.0
  %34 = vmatpush.msra.mxu0 0.0
  %35 = vmatpush.msra.mxu0 0.0
  %36 = vmatpush.msra.mxu0 0.0
  %37 = vmatpush.msra.mxu0 0.0
  %38 = vmatpush.msra.mxu0 0.0
  %39 = vmatpush.msra.mxu0 0.0
  %40 = vmatpush.msra.mxu0 0.0
  %41 = vmatpush.msra.mxu0 0.0
  %42 = vmatpush.msra.mxu0 0.0
  %43 = vmatpush.msra.mxu0 0.0
  %44 = vmatpush.msra.mxu0 0.0
  %45 = vmatpush.msra.mxu0 %v21
  %46 = vmatmul.f32.gmra.mxu0 %v28
  %v47 = vpop.f32.mrf.mxu0
  %v48 = vadd.f32 %v24, %v47
  %49 = vdwg.mxu0
  %v50 = vmax.f32 %v48, 0.0
  %v51 = vld [vmem:[%s3] sm:$0xff]
  %v52 = vld [vmem:[%s3 + $0x8] sm:$0xff]
  %v53 = vld [vmem:[%s3 + $0x10] sm:$0xff]
  %v54 = vld [vmem:[%s3 + $0x18] sm:$0xff]
  %v55 = vld [vmem:[%s3 + $0x20] sm:$0xff]
  %v56 = vld [vmem:[%s3 + $0x28] sm:$0xff]
  %v57 = vld [vmem:[%s3 + $0x30] sm:$0xff]
  %v58 = vld [vmem:[%s3 + $0x38] sm:$0xff]
  %v59 = vld [vmem:[%s3 + $0x40] sm:$0xff]
  %v60 = vld [vmem:[%s3 + $0x48] sm:$0xff]
  %v61 = vld [vmem:[%s3 + $0x50] sm:$0xff]
  %v62 = vld [vmem:[%s3 + $0x58] sm:$0xff]
  %v63 = vld [vmem:[%s3 + $0x60] sm:$0xff]
  %v64 = vld [vmem:[%s3 + $0x68] sm:$0xff]
  %v65 = vld [vmem:[%s3 + $0x70] sm:$0xff]
  %v66 = vld [vmem:[%s3 + $0x78] sm:$0xff]
  %v67 = vld [vmem:[%s4] sm:$0x1]
  %v69 = vperm.slane %v67, 0
  %71 = vmatpush.msra.mxu0 %v66
  %72 = vmatpush.msra.mxu0 %v65
  %73 = vmatpush.msra.mxu0 %v64
  %74 = vmatpush.msra.mxu0 %v63
  %75 = vmatpush.msra.mxu0 %v62
  %76 = vmatpush.msra.mxu0 %v61
  %77 = vmatpush.msra.mxu0 %v60
  %78 = vmatpush.msra.mxu0 %v59
  %79 = vmatpush.msra.mxu0 %v58
  %80 = vmatpush.msra.mxu0 %v57
  %81 = vmatpush.msra.mxu0 %v56
  %82 = vmatpush.msra.mxu0 %v55
  %83 = vmatpush.msra.mxu0 %v54
  %84 = vmatpush.msra.mxu0 %v53
  %85 = vmatpush.msra.mxu0 %v52
  %86 = vmatpush.msra.mxu0 %v51
  %87 = vmatmul.f32.gmra.mxu0 %v50
  %v88 = vpop.f32.mrf.mxu0
  %v89 = vadd.f32 %v69, %v88
  %90 = vdwg.mxu0
  %v91 = vsel %vm26, %v89, -inf
  %92 = vmax.xlane.f32.xlu0 %v91
  %v93 = vpop.xlane.xlu0 %92
  %v94 = vsub.f32 %v89, %v93
  %v95 = vmul.f32 %v94, 1.442695
  %v96 = vpow.pop %v95
  %v97 = vsel %vm26, %v96, 0.0
  %98 = vadd.xlane.f32.xlu0 %v97
  %v99 = vpop.xlane.xlu0 %98
  %v100 = vrcp.pop %v99
  %v101 = vmul.f32 %v99, %v100
  %v102 = vsub.f32 2.0, %v101
  %v103 = vmul.f32 %v100, %v102
  %v104 = vmul.f32 %v96, %v103
  %105 = vst.msk [vmem:[%s5] sm:$0xff] %vm26, %v104
  // Predicated region
  $region22: #{actor_net_forward.1} parent=0 // pred_check
    _
  $region23: #{actor_net_forward.1} parent=0 // pred_check_branch
    %107 = sbr.rel (0) target = $region25
  $region24: #{actor_net_forward.1} parent=0 // pred_region
    _
  $region25: #{actor_net_forward.1} parent=0 // pred_fallthru
    _
  // Predicated region
  $region26: #{actor_net_forward.1} parent=0 // pred_check
    _
  $region27: #{actor_net_forward.1} parent=0 // pred_check_branch
    %109 = sbr.rel (0) target = $region29
  $region28: #{actor_net_forward.1} parent=0 // pred_region
    _
  $region29: #{actor_net_forward.1} parent=0 // pred_fallthru
    _

</llo_original>
